<compile_context>
chip_gen: v7x
topology: tpu7x:2x2x1
jax: 0.10.0
libtpu: 0.0.40
codegen_flags: <defaults>
</compile_context>

<pallas_src>
import jax
import jax.numpy as jnp
from jax.experimental import pallas as pl
from jax.experimental.pallas import tpu as pltpu


# ----------------------------- Pallas kernel --------------------------------
def deepfm_kernel(
    x_ref,        # (TB, F)               VMEM
    w0_ref,       # (1,)    FM bias       SMEM scalar
    wcat_ref,     # (F, H0+1+K)  [dw0 | w1 | w2] fused slab
    w2sq_ref,     # (F, K)  precomputed w2*w2
    db0_ref,      # (1, H0)
    dw1_ref,      # (H0, H1)
    db1_ref,      # (1, H1)
    fcw_ref,      # (1, H1) final fc weight as a row (VPU dot)
    fcb_ref,      # (1,)    fc bias       SMEM scalar
    out_ref,      # (TB, 1)
):
    x = x_ref[...]                                                   # (TB, F)
    w0 = w0_ref[0]
    fcb = fcb_ref[0]

    H0 = db0_ref.shape[1]
    K = w2sq_ref.shape[1]

    # ---- single fused lane-dense MXU pass over the x stream ----------------
    # columns: [0:H0) -> DNN layer-0 pre-act, [H0] -> FM first order, [H0+1:) -> xV
    y = jnp.dot(x, wcat_ref[...], preferred_element_type=jnp.float32)  # (TB, H0+1+K)
    h0_pre = y[:, :H0]                                                  # (TB, H0)
    first = y[:, H0:H0 + 1]                                             # (TB, 1)
    xv = y[:, H0 + 1:H0 + 1 + K]                                        # (TB, K)

    # ---- FM second order ----------------------------------------------------
    x2v2 = jnp.dot(x * x, w2sq_ref[...],
                   preferred_element_type=jnp.float32)                  # (TB, K)
    second = 0.5 * (jnp.sum(xv * xv, axis=1, keepdims=True)
                    - jnp.sum(x2v2, axis=1, keepdims=True))             # (TB, 1)
    wide = w0 + first + second                                          # (TB, 1)

    # ---- DNN (deep) part (dropout p=0.0 -> identity) ------------------------
    h = jnp.maximum(h0_pre + db0_ref[...], 0.0)                         # (TB, H0)
    h = jnp.dot(h, dw1_ref[...], preferred_element_type=jnp.float32) + db1_ref[...]
    h = jnp.maximum(h, 0.0)                                             # (TB, H1)
    # final fc (H1 -> 1) on VPU + XLU lane-reduce instead of a 1-wide MXU pass
    deep = jnp.sum(h * fcw_ref[...], axis=1, keepdims=True) + fcb       # (TB, 1)

    out_ref[...] = jax.nn.sigmoid(wide + deep)                          # (TB, 1)


# ----------------------------- wrapper ---------------------------------------
def _round_up(a, m):
    return (a + m - 1) // m * m


def deepfm_pallas(x_feat, params, *, tile_b=512):
    """x_feat: (B, fea_num) float32 fully-assembled feature matrix."""
    B, F = x_feat.shape
    (w0, w1, w2, dw0, db0, dw1, db1, fcw, fcb) = params
    K = w2.shape[1]
    H0 = dw0.shape[1]
    H1 = dw1.shape[1]

    # ---- wrapper-side weight packing (grid-invariant, done once) ------------
    wcat = jnp.concatenate([dw0, w1, w2], axis=1)      # (F, H0+1+K)
    w2_sq = w2 * w2                                    # hoisted out of the kernel
    fcw_row = fcw.reshape(1, H1)                       # row layout for VPU dot
    w0_s = w0.reshape(1)
    fcb_s = fcb.reshape(1)
    Wc = H0 + 1 + K

    # ---- batch tiling: 128/256-aligned tiles, pad batch instead of asserting
    tb = min(tile_b, _round_up(B, 128))
    tb = _round_up(tb, 128)
    B_pad = _round_up(B, tb)
    if B_pad != B:
        x_feat = jnp.pad(x_feat, ((0, B_pad - B), (0, 0)))
    grid = (B_pad // tb,)   # at real batch sizes grid >= 2 -> megacore sharding

    full = lambda shape: pl.BlockSpec(shape, lambda i: (0, 0))
    smem = pl.BlockSpec(memory_space=pltpu.MemorySpace.SMEM)

    in_specs = [
        pl.BlockSpec((tb, F), lambda i: (i, 0)),   # x tile over batch
        smem,                                      # w0 (scalar)
        full((F, Wc)),                             # fused [dw0 | w1 | w2]
        full((F, K)),                              # w2^2
        full((1, H0)),                             # dnn b0
        full((H0, H1)),                            # dnn w1
        full((1, H1)),                             # dnn b1
        full((1, H1)),                             # fc w (row)
        smem,                                      # fc b (scalar)
    ]
    out_spec = pl.BlockSpec((tb, 1), lambda i: (i, 0))

    # advisory cost so XLA can overlap the embedding gather/concat glue
    flops = 2 * B_pad * (F * (Wc + K) + H0 * H1 + H1)
    weight_bytes = 4 * (F * (Wc + K) + H0 + H0 * H1 + H1 + H1 + 2)
    cost = pl.CostEstimate(
        flops=flops,
        transcendentals=B_pad,                     # sigmoid
        bytes_accessed=B_pad * F * 4 + B_pad * 4 + weight_bytes,
    )

    out = pl.pallas_call(
        deepfm_kernel,
        out_shape=jax.ShapeDtypeStruct((B_pad, 1), jnp.float32),
        grid=grid,
        in_specs=in_specs,
        out_specs=out_spec,
        compiler_params=pltpu.CompilerParams(
            dimension_semantics=("parallel",)),
        cost_estimate=cost,
    )(x_feat, w0_s, wcat, w2_sq, db0, dw1, db1, fcw_row, fcb_s)

    return out[:B]


# ----------------------------- model setup (glue) -----------------------------
def init_deepfm_params(key, num_dense, sparse_fea_cols, hidden_units):
    """Deterministic synthetic parameter init mirroring DeepFM.__init__ shapes."""
    embed_dim = sparse_fea_cols[0]["embed_dim"]
    fea_num = num_dense + len(sparse_fea_cols) * embed_dim
    hidden = [fea_num] + list(hidden_units)   # hidden_units.insert(0, fea_num)

    keys = jax.random.split(key, 16)
    ki = iter(keys)

    # Embedding tables (nn.Embedding -> N(0,1))
    emb_tables = [
        jax.random.normal(next(ki), (fea["feat_num"], fea["embed_dim"]),
                          dtype=jnp.float32)
        for fea in sparse_fea_cols
    ]

    # FM params: w0 = zeros(1), w1/w2 ~ U[0,1)
    w0 = jnp.zeros((1, 1), dtype=jnp.float32)
    w1 = jax.random.uniform(next(ki), (fea_num, 1), dtype=jnp.float32)
    w2 = jax.random.uniform(next(ki), (fea_num, embed_dim), dtype=jnp.float32)

    # DNN linears (stored as (in, out)) + biases as (1, out)
    def linear(kw, kb, fan_in, fan_out):
        lim = 1.0 / jnp.sqrt(jnp.float32(fan_in))
        w = jax.random.uniform(kw, (fan_in, fan_out), minval=-lim, maxval=lim,
                               dtype=jnp.float32)
        b = jax.random.uniform(kb, (1, fan_out), minval=-lim, maxval=lim,
                               dtype=jnp.float32)
        return w, b

    dw0, db0 = linear(next(ki), next(ki), hidden[0], hidden[1])
    dw1, db1 = linear(next(ki), next(ki), hidden[1], hidden[2])
    fcw, fcb = linear(next(ki), next(ki), hidden[2], 1)

    params = (w0, w1, w2, dw0, db0, dw1, db1, fcw, fcb)
    return emb_tables, params, fea_num


def assemble_features(x, num_dense, emb_tables):
    """Embedding lookup + concat (plain-JAX glue, matches torch ordering)."""
    # TODO(synk): data-dependent embedding gather stays in XLA; Pallas handles the dense hot path.
    dense_x = x[:, :num_dense]
    sparse_ids = x[:, num_dense:].astype(jnp.int32)
    sparse_embeds = [emb_tables[i][sparse_ids[:, i]]
                     for i in range(sparse_ids.shape[1])]
    sparse_embeds = jnp.concatenate(sparse_embeds, axis=-1)
    # torch.cat([sparse_embeds, dense_x], dim=-1)
    return jnp.concatenate([sparse_embeds, dense_x], axis=-1).astype(jnp.float32)


# pure-JAX reference for a correctness sanity check
def deepfm_ref(x_feat, params):
    (w0, w1, w2, dw0, db0, dw1, db1, fcw, fcb) = params
    first = w0[0, 0] + x_feat @ w1
    second = 0.5 * jnp.sum((x_feat @ w2) ** 2 - (x_feat ** 2) @ (w2 ** 2),
                           axis=1, keepdims=True)
    wide = first + second
    h = jnp.maximum(x_feat @ dw0 + db0, 0.0)
    h = jnp.maximum(h @ dw1 + db1, 0.0)
    deep = h @ fcw + fcb
    return jax.nn.sigmoid(wide + deep)


# ----------------------------- main ------------------------------------------
if __name__ == "__main__":
    key = jax.random.PRNGKey(0)

    # Small synthetic config: 3 dense features, 5 sparse features, embed_dim=8
    num_dense = 3
    sparse_fea_cols = [{"feat_num": 10, "embed_dim": 8} for _ in range(5)]
    hidden_units = [64, 32]           # DNN hidden layers (fea_num prepended inside)
    B = 16                            # small demo batch (wrapper pads to a tile)

    k_param, k_dense, k_sparse = jax.random.split(key, 3)
    emb_tables, params, fea_num = init_deepfm_params(
        k_param, num_dense, sparse_fea_cols, hidden_units)

    # Raw input like the torch module: dense floats + sparse integer ids
    dense_part = jax.random.normal(k_dense, (B, num_dense), dtype=jnp.float32)
    sparse_part = jax.random.randint(
        k_sparse, (B, len(sparse_fea_cols)), 0, sparse_fea_cols[0]["feat_num"]
    ).astype(jnp.float32)
    x_raw = jnp.concatenate([dense_part, sparse_part], axis=-1)   # (B, 8)

    x_feat = assemble_features(x_raw, num_dense, emb_tables)      # (B, fea_num=43)

    out = deepfm_pallas(x_feat, params)     # tile_b defaults to 512, clamped for tiny B
    out = jax.block_until_ready(out)

    ref = deepfm_ref(x_feat, params)
    assert out.shape == (B, 1)
    assert bool(jnp.all(jnp.isfinite(out)))
    assert jnp.allclose(out, ref, atol=1e-4, rtol=1e-4), "mismatch vs reference"

    print("KERNEL_OK")
</pallas_src>

<mosaic_0001>
module attributes {stable_mosaic.version = 11 : i64} {
  func.func @deepfm_kernel(%arg0: i32, %arg1: memref<128x43xf32, #tpu.memory_space<vmem>>, %arg2: memref<1xf32, #tpu.memory_space<smem>>, %arg3: memref<43x73xf32, #tpu.memory_space<vmem>>, %arg4: memref<43x8xf32, #tpu.memory_space<vmem>>, %arg5: memref<1x64xf32, #tpu.memory_space<vmem>>, %arg6: memref<64x32xf32, #tpu.memory_space<vmem>>, %arg7: memref<1x32xf32, #tpu.memory_space<vmem>>, %arg8: memref<1x32xf32, #tpu.memory_space<vmem>>, %arg9: memref<1xf32, #tpu.memory_space<smem>>, %arg10: memref<128x1xf32, #tpu.memory_space<vmem>>) attributes {dimension_semantics = [#tpu.dimension_semantics<parallel>], iteration_bounds = array<i64: 1>, scalar_prefetch = 0 : i64, scratch_operands = 0 : i64, tpu.core_type = #tpu.core_type<tc>, window_params = [{transform_indices = @transform_0, window_bounds = array<i64: 128, 43>}, {transform_indices = @transform_1, window_bounds = array<i64: 1>}, {pipeline_mode = #tpu.pipeline_mode<synchronous>, transform_indices = @transform_2, window_bounds = array<i64: 43, 73>}, {pipeline_mode = #tpu.pipeline_mode<synchronous>, transform_indices = @transform_3, window_bounds = array<i64: 43, 8>}, {pipeline_mode = #tpu.pipeline_mode<synchronous>, transform_indices = @transform_4, window_bounds = array<i64: 1, 64>}, {pipeline_mode = #tpu.pipeline_mode<synchronous>, transform_indices = @transform_5, window_bounds = array<i64: 64, 32>}, {pipeline_mode = #tpu.pipeline_mode<synchronous>, transform_indices = @transform_6, window_bounds = array<i64: 1, 32>}, {pipeline_mode = #tpu.pipeline_mode<synchronous>, transform_indices = @transform_7, window_bounds = array<i64: 1, 32>}, {transform_indices = @transform_8, window_bounds = array<i64: 1>}, {transform_indices = @transform_9, window_bounds = array<i64: 128, 1>}]} {
    %c0 = arith.constant 0 : index
    %c0_0 = arith.constant 0 : index
    %0 = vector.load %arg1[%c0, %c0_0] : memref<128x43xf32, #tpu.memory_space<vmem>>, vector<128x43xf32>
    %c0_1 = arith.constant 0 : index
    %1 = memref.load %arg2[%c0_1] : memref<1xf32, #tpu.memory_space<smem>>
    %c0_2 = arith.constant 0 : index
    %2 = memref.load %arg9[%c0_2] : memref<1xf32, #tpu.memory_space<smem>>
    %c0_3 = arith.constant 0 : index
    %c0_4 = arith.constant 0 : index
    %3 = vector.load %arg3[%c0_3, %c0_4] : memref<43x73xf32, #tpu.memory_space<vmem>>, vector<43x73xf32>
    %cst = arith.constant dense<0.000000e+00> : vector<128x73xf32>
    %4 = tpu.matmul %0, %3, %cst {dimension_numbers = #tpu.dot_dimension_numbers<[1], [0], [0], [1], [0, 0, 1, 1], [], []>} : vector<128x43xf32>, vector<43x73xf32>, vector<128x73xf32> -> vector<128x73xf32>
    %5 = vector.extract_strided_slice %4 {offsets = [0, 0], sizes = [128, 64], strides = [1, 1]} : vector<128x73xf32> to vector<128x64xf32>
    %6 = vector.extract_strided_slice %4 {offsets = [0, 64], sizes = [128, 1], strides = [1, 1]} : vector<128x73xf32> to vector<128x1xf32>
    %7 = vector.extract_strided_slice %4 {offsets = [0, 65], sizes = [128, 8], strides = [1, 1]} : vector<128x73xf32> to vector<128x8xf32>
    %8 = arith.mulf %0, %0 : vector<128x43xf32>
    %c0_5 = arith.constant 0 : index
    %c0_6 = arith.constant 0 : index
    %9 = vector.load %arg4[%c0_5, %c0_6] : memref<43x8xf32, #tpu.memory_space<vmem>>, vector<43x8xf32>
    %cst_7 = arith.constant dense<0.000000e+00> : vector<128x8xf32>
    %10 = tpu.matmul %8, %9, %cst_7 {dimension_numbers = #tpu.dot_dimension_numbers<[1], [0], [0], [1], [0, 0, 1, 1], [], []>} : vector<128x43xf32>, vector<43x8xf32>, vector<128x8xf32> -> vector<128x8xf32>
    %11 = arith.mulf %7, %7 : vector<128x8xf32>
    %cst_8 = arith.constant dense<0.000000e+00> : vector<128xf32>
    %12 = vector.multi_reduction <add>, %11, %cst_8 [1] : vector<128x8xf32> to vector<128xf32>
    %13 = vector.shape_cast %12 : vector<128xf32> to vector<128x1xf32>
    %cst_9 = arith.constant dense<0.000000e+00> : vector<128xf32>
    %14 = vector.multi_reduction <add>, %10, %cst_9 [1] : vector<128x8xf32> to vector<128xf32>
    %15 = vector.shape_cast %14 : vector<128xf32> to vector<128x1xf32>
    %16 = arith.subf %13, %15 : vector<128x1xf32>
    %cst_10 = arith.constant 5.000000e-01 : f32
    %17 = vector.broadcast %cst_10 : f32 to vector<128x1xf32>
    %18 = arith.mulf %17, %16 : vector<128x1xf32>
    %19 = vector.broadcast %1 : f32 to vector<128x1xf32>
    %20 = arith.addf %19, %6 : vector<128x1xf32>
    %21 = arith.addf %20, %18 : vector<128x1xf32>
    %c0_11 = arith.constant 0 : index
    %c0_12 = arith.constant 0 : index
    %22 = vector.load %arg5[%c0_11, %c0_12] : memref<1x64xf32, #tpu.memory_space<vmem>>, vector<1x64xf32>
    %23 = vector.broadcast %22 : vector<1x64xf32> to vector<128x64xf32>
    %24 = arith.addf %5, %23 : vector<128x64xf32>
    %cst_13 = arith.constant 0.000000e+00 : f32
    %25 = vector.broadcast %cst_13 : f32 to vector<128x64xf32>
    %26 = arith.maximumf %24, %25 : vector<128x64xf32>
    %c0_14 = arith.constant 0 : index
    %c0_15 = arith.constant 0 : index
    %27 = vector.load %arg6[%c0_14, %c0_15] : memref<64x32xf32, #tpu.memory_space<vmem>>, vector<64x32xf32>
    %cst_16 = arith.constant dense<0.000000e+00> : vector<128x32xf32>
    %28 = tpu.matmul %26, %27, %cst_16 {dimension_numbers = #tpu.dot_dimension_numbers<[1], [0], [0], [1], [0, 0, 1, 1], [], []>} : vector<128x64xf32>, vector<64x32xf32>, vector<128x32xf32> -> vector<128x32xf32>
    %c0_17 = arith.constant 0 : index
    %c0_18 = arith.constant 0 : index
    %29 = vector.load %arg7[%c0_17, %c0_18] : memref<1x32xf32, #tpu.memory_space<vmem>>, vector<1x32xf32>
    %30 = vector.broadcast %29 : vector<1x32xf32> to vector<128x32xf32>
    %31 = arith.addf %28, %30 : vector<128x32xf32>
    %cst_19 = arith.constant 0.000000e+00 : f32
    %32 = vector.broadcast %cst_19 : f32 to vector<128x32xf32>
    %33 = arith.maximumf %31, %32 : vector<128x32xf32>
    %c0_20 = arith.constant 0 : index
    %c0_21 = arith.constant 0 : index
    %34 = vector.load %arg8[%c0_20, %c0_21] : memref<1x32xf32, #tpu.memory_space<vmem>>, vector<1x32xf32>
    %35 = vector.broadcast %34 : vector<1x32xf32> to vector<128x32xf32>
    %36 = arith.mulf %33, %35 : vector<128x32xf32>
    %cst_22 = arith.constant dense<0.000000e+00> : vector<128xf32>
    %37 = vector.multi_reduction <add>, %36, %cst_22 [1] : vector<128x32xf32> to vector<128xf32>
    %38 = vector.shape_cast %37 : vector<128xf32> to vector<128x1xf32>
    %39 = vector.broadcast %2 : f32 to vector<128x1xf32>
    %40 = arith.addf %38, %39 : vector<128x1xf32>
    %41 = arith.addf %21, %40 : vector<128x1xf32>
    %42 = arith.negf %41 : vector<128x1xf32>
    %43 = math.exp %42 : vector<128x1xf32>
    %cst_23 = arith.constant 1.000000e+00 : f32
    %44 = vector.broadcast %cst_23 : f32 to vector<128x1xf32>
    %45 = arith.addf %44, %43 : vector<128x1xf32>
    %46 = arith.divf %44, %45 : vector<128x1xf32>
    %c0_24 = arith.constant 0 : index
    %c0_25 = arith.constant 0 : index
    %47 = vector.load %arg10[%c0_24, %c0_25] : memref<128x1xf32, #tpu.memory_space<vmem>>, vector<128x1xf32>
    tpu.vector_store %arg10[%c0_24, %c0_25], %46 {strides = array<i32>} : memref<128x1xf32, #tpu.memory_space<vmem>>, vector<128x1xf32>,
    return
  }
  func.func @transform_0(%arg0: i32) -> (i32, i32) {
    %c0_i32 = arith.constant 0 : i32
    %c0_i32_0 = arith.constant 0 : i32
    return %arg0, %c0_i32 : i32, i32
  }
  func.func @transform_1(%arg0: i32) -> i32 {
    %c0_i32 = arith.constant 0 : i32
    %c0_i32_0 = arith.constant 0 : i32
    return %c0_i32 : i32
  }
  func.func @transform_2(%arg0: i32) -> (i32, i32) {
    %c0_i32 = arith.constant 0 : i32
    %c0_i32_0 = arith.constant 0 : i32
    %c0_i32_1 = arith.constant 0 : i32
    return %c0_i32, %c0_i32_0 : i32, i32
  }
  func.func @transform_3(%arg0: i32) -> (i32, i32) {
    %c0_i32 = arith.constant 0 : i32
    %c0_i32_0 = arith.constant 0 : i32
    %c0_i32_1 = arith.constant 0 : i32
    return %c0_i32, %c0_i32_0 : i32, i32
  }
  func.func @transform_4(%arg0: i32) -> (i32, i32) {
    %c0_i32 = arith.constant 0 : i32
    %c0_i32_0 = arith.constant 0 : i32
    %c0_i32_1 = arith.constant 0 : i32
    return %c0_i32, %c0_i32_0 : i32, i32
  }
  func.func @transform_5(%arg0: i32) -> (i32, i32) {
    %c0_i32 = arith.constant 0 : i32
    %c0_i32_0 = arith.constant 0 : i32
    %c0_i32_1 = arith.constant 0 : i32
    return %c0_i32, %c0_i32_0 : i32, i32
  }
  func.func @transform_6(%arg0: i32) -> (i32, i32) {
    %c0_i32 = arith.constant 0 : i32
    %c0_i32_0 = arith.constant 0 : i32
    %c0_i32_1 = arith.constant 0 : i32
    return %c0_i32, %c0_i32_0 : i32, i32
  }
  func.func @transform_7(%arg0: i32) -> (i32, i32) {
    %c0_i32 = arith.constant 0 : i32
    %c0_i32_0 = arith.constant 0 : i32
    %c0_i32_1 = arith.constant 0 : i32
    return %c0_i32, %c0_i32_0 : i32, i32
  }
  func.func @transform_8(%arg0: i32) -> i32 {
    %c0_i32 = arith.constant 0 : i32
    %c0_i32_0 = arith.constant 0 : i32
    return %c0_i32 : i32
  }
  func.func @transform_9(%arg0: i32) -> (i32, i32) {
    %c0_i32 = arith.constant 0 : i32
    %c0_i32_0 = arith.constant 0 : i32
    return %arg0, %c0_i32 : i32, i32
  }
}

</mosaic_0001>

<llo_original>
// kernel: tpu_custom_call.1
$region0: #{tpu_custom_call.1}
  #allocation0 [shape = 'u32[]', space=smem, size = 0x4, offset = 0x4, fixed_abs, tag = 'smem constant byte address 0x4 - core index']
  #allocation1 [shape = 'u32[144,128]{1,0:T(1,128)}', space=vmem, size = 0x12000, scoped, tag = 'internal scratch']
  #allocation2 [shape = 'f32[1]{0:T(128)S(6)}', space=smem, size = 0x200, scoped, tag = 'scoped memory for tpu_custom_call.1']
  #allocation3 [shape = 'f32[1]{0:T(128)S(6)}', space=smem, size = 0x200, scoped, tag = 'scoped memory for tpu_custom_call.1']
  %s0 = inlined_call_operand.vmem [shape: f32[128,43], index: 0, kind: input, shape index: {}]
  %s1 = inlined_call_operand.<no memory space> [shape: f32[1], index: 1, kind: input, shape index: {}]
  %s2 = inlined_call_operand.vmem [shape: f32[43,73], index: 2, kind: input, shape index: {}]
  %s3 = inlined_call_operand.vmem [shape: f32[43,8], index: 3, kind: input, shape index: {}]
  %s4 = inlined_call_operand.vmem [shape: f32[1,64], index: 4, kind: input, shape index: {}]
  %s5 = inlined_call_operand.vmem [shape: f32[64,32], index: 5, kind: input, shape index: {}]
  %s6 = inlined_call_operand.vmem [shape: f32[1,32], index: 6, kind: input, shape index: {}]
  %s7 = inlined_call_operand.vmem [shape: f32[1,32], index: 7, kind: input, shape index: {}]
  %s8 = inlined_call_operand.<no memory space> [shape: f32[1], index: 8, kind: input, shape index: {}]
  %s9 = inlined_call_operand.vmem [shape: f32[128,1], index: 9, kind: output, shape index: {}]
  %s10 = sld [smem:[#allocation0]]
  $region46: #{tpu_custom_call.1} parent=0
    _
  %s12 = ssub.s32 1, %s10
  %s13 = scalar_select 0, %s12, %s10
  %14 = sst [smem:[#allocation2]] %s1
  %15 = sst [smem:[#allocation3]] %s8
  // Predicated region
  $region2: #{tpu_custom_call.1} parent=0 // pred_check
    _
  $region3: #{tpu_custom_call.1} parent=0 // pred_check_branch
    %17 = sbr.rel (0) target = $region5
  $region4: #{tpu_custom_call.1} parent=0 // pred_region
    _
  $region5: #{tpu_custom_call.1} parent=0 // pred_fallthru
    _
  // Predicated region
  $region6: #{tpu_custom_call.1} parent=0 // pred_check
    _
  $region7: #{tpu_custom_call.1} parent=0 // pred_check_branch
    %19 = sbr.rel (0) target = $region9
  $region8: #{tpu_custom_call.1} parent=0 // pred_region
    _
  $region9: #{tpu_custom_call.1} parent=0 // pred_fallthru
    _
  // Predicated region
  $region10: #{tpu_custom_call.1} parent=0 // pred_check
    _
  $region11: #{tpu_custom_call.1} parent=0 // pred_check_branch
    %21 = sbr.rel (0) target = $region13
  $region12: #{tpu_custom_call.1} parent=0 // pred_region
    _
  $region13: #{tpu_custom_call.1} parent=0 // pred_fallthru
    _
  // Predicated region
  $region14: #{tpu_custom_call.1} parent=0 // pred_check
    _
  $region15: #{tpu_custom_call.1} parent=0 // pred_check_branch
    %23 = sbr.rel (0) target = $region17
  $region16: #{tpu_custom_call.1} parent=0 // pred_region
    _
  $region17: #{tpu_custom_call.1} parent=0 // pred_fallthru
    _
  // Predicated region
  $region18: #{tpu_custom_call.1} parent=0 // pred_check
    _
  $region19: #{tpu_custom_call.1} parent=0 // pred_check_branch
    %25 = sbr.rel (0) target = $region21
  $region20: #{tpu_custom_call.1} parent=0 // pred_region
    _
  $region21: #{tpu_custom_call.1} parent=0 // pred_fallthru
    _
  // Predicated region
  $region22: #{tpu_custom_call.1} parent=0 // pred_check
    _
  $region23: #{tpu_custom_call.1} parent=0 // pred_check_branch
    %27 = sbr.rel (0) target = $region25
  $region24: #{tpu_custom_call.1} parent=0 // pred_region
    _
  $region25: #{tpu_custom_call.1} parent=0 // pred_fallthru
    _
  // Predicated region
  $region26: #{tpu_custom_call.1} parent=0 // pred_check
    _
  $region27: #{tpu_custom_call.1} parent=0 // pred_check_branch
    %29 = sbr.rel (0) target = $region29
  $region28: #{tpu_custom_call.1} parent=0 // pred_region
    _
  $region29: #{tpu_custom_call.1} parent=0 // pred_fallthru
    _
  // Predicated region
  $region30: #{tpu_custom_call.1} parent=0 // pred_check
    _
  $region31: #{tpu_custom_call.1} parent=0 // pred_check_branch
    %31 = sbr.rel (0) target = $region33
  $region32: #{tpu_custom_call.1} parent=0 // pred_region
    _
  $region33: #{tpu_custom_call.1} parent=0 // pred_fallthru
    _
  // Predicated region
  $region34: #{tpu_custom_call.1} parent=0 // pred_check
    _
  $region35: #{tpu_custom_call.1} parent=0 // pred_check_branch
    %33 = sbr.rel (0) target = $region37
  $region36: #{tpu_custom_call.1} parent=0 // pred_region
    _
  $region37: #{tpu_custom_call.1} parent=0 // pred_fallthru
    _
  %v34 = vld [vmem:[%s0] sm:$0xff]
  %v35 = vld [vmem:[%s0 + $0x8] sm:$0xff]
  %v36 = vld [vmem:[%s0 + $0x10] sm:$0xff]
  %v37 = vld [vmem:[%s0 + $0x18] sm:$0xff]
  %v38 = vld [vmem:[%s0 + $0x20] sm:$0xff]
  %v39 = vld [vmem:[%s0 + $0x28] sm:$0xff]
  %v40 = vld [vmem:[%s0 + $0x30] sm:$0xff]
  %v41 = vld [vmem:[%s0 + $0x38] sm:$0xff]
  %v42 = vld [vmem:[%s0 + $0x40] sm:$0xff]
  %v43 = vld [vmem:[%s0 + $0x48] sm:$0xff]
  %v44 = vld [vmem:[%s0 + $0x50] sm:$0xff]
  %v45 = vld [vmem:[%s0 + $0x58] sm:$0xff]
  %v46 = vld [vmem:[%s0 + $0x60] sm:$0xff]
  %v47 = vld [vmem:[%s0 + $0x68] sm:$0xff]
  %v48 = vld [vmem:[%s0 + $0x70] sm:$0xff]
  %v49 = vld [vmem:[%s0 + $0x78] sm:$0xff]
  %s50 = sld [smem:[#allocation2]]
  %s51 = sld [smem:[#allocation3]]
  %v52 = vld [vmem:[%s2] sm:$0xff]
  %v53 = vld [vmem:[%s2 + $0x8] sm:$0xff]
  %v54 = vld [vmem:[%s2 + $0x10] sm:$0xff]
  %v55 = vld [vmem:[%s2 + $0x18] sm:$0xff]
  %v56 = vld [vmem:[%s2 + $0x20] sm:$0xff]
  %v57 = vld [vmem:[%s2 + $0x28] sm:$0x7]
  %vm58 = vcmask 351232
  %v60 = vsel %vm58, %v34, 0
  %v63 = vsel %vm58, %v35, 0
  %v66 = vsel %vm58, %v36, 0
  %v69 = vsel %vm58, %v37, 0
  %v72 = vsel %vm58, %v38, 0
  %v75 = vsel %vm58, %v39, 0
  %v78 = vsel %vm58, %v40, 0
  %v81 = vsel %vm58, %v41, 0
  %v84 = vsel %vm58, %v42, 0
  %v87 = vsel %vm58, %v43, 0
  %v90 = vsel %vm58, %v44, 0
  %v93 = vsel %vm58, %v45, 0
  %v96 = vsel %vm58, %v46, 0
  %v99 = vsel %vm58, %v47, 0
  %v102 = vsel %vm58, %v48, 0
  %v105 = vsel %vm58, %v49, 0
  %vm107 = vcmask 1042432
  %v109 = vsel %vm107, %v57, 0
  %111 = vmatprep.subr.mxu0 0.0
  %112 = vmatpush1.msra.mxu0 %v52
  %113 = vmatprep.subr.mxu0 0.0
  %114 = vmatpush1.msra.mxu0 %v53
  %115 = vmatprep.subr.mxu0 0.0
  %116 = vmatpush1.msra.mxu0 %v54
  %117 = vmatprep.subr.mxu0 0.0
  %118 = vmatpush1.msra.mxu0 %v55
  %119 = vmatprep.subr.mxu0 0.0
  %120 = vmatpush1.msra.mxu0 %v56
  %121 = vmatprep.subr.mxu0 0.0
  %122 = vmatpush1.msra.mxu0 %v109
  %123 = vmatprep.subr.mxu0 0.0
  %124 = vmatpush1.msra.mxu0 0.0
  %125 = vmatprep.subr.mxu0 0.0
  %126 = vmatpush1.msra.mxu0 0.0
  %127 = vmatprep.subr.mxu0 0.0
  %128 = vmatpush1.msra.mxu0 0.0
  %129 = vmatprep.subr.mxu0 0.0
  %130 = vmatpush1.msra.mxu0 0.0
  %131 = vmatprep.subr.mxu0 0.0
  %132 = vmatpush1.msra.mxu0 0.0
  %133 = vmatprep.subr.mxu0 0.0
  %134 = vmatpush1.msra.mxu0 0.0
  %135 = vmatprep.subr.mxu0 0.0
  %136 = vmatpush1.msra.mxu0 0.0
  %137 = vmatprep.subr.mxu0 0.0
  %138 = vmatpush1.msra.mxu0 0.0
  %139 = vmatprep.subr.mxu0 0.0
  %140 = vmatpush1.msra.mxu0 0.0
  %141 = vmatprep.subr.mxu0 0.0
  %142 = vmatpush1.msra.mxu0 0.0
  %143 = vmatprep.subr.mxu0 0.0
  %144 = vmatpush1.msra.mxu0 0.0
  %145 = vmatprep.subr.mxu0 0.0
  %146 = vmatpush1.msra.mxu0 0.0
  %147 = vmatprep.subr.mxu0 0.0
  %148 = vmatpush1.msra.mxu0 0.0
  %149 = vmatprep.subr.mxu0 0.0
  %150 = vmatpush1.msra.mxu0 0.0
  %151 = vmatprep.subr.mxu0 0.0
  %152 = vmatpush1.msra.mxu0 0.0
  %153 = vmatprep.subr.mxu0 0.0
  %154 = vmatpush1.msra.mxu0 0.0
  %155 = vmatprep.subr.mxu0 0.0
  %156 = vmatpush1.msra.mxu0 0.0
  %157 = vmatprep.subr.mxu0 0.0
  %158 = vmatpush1.msra.mxu0 0.0
  %159 = vmatprep.subr.mxu0 0.0
  %160 = vmatpush1.msra.mxu0 0.0
  %161 = vmatprep.subr.mxu0 0.0
  %162 = vmatpush1.msra.mxu0 0.0
  %163 = vmatprep.subr.mxu0 0.0
  %164 = vmatpush1.msra.mxu0 0.0
  %165 = vmatprep.subr.mxu0 0.0
  %166 = vmatpush1.msra.mxu0 0.0
  %167 = vmatprep.subr.mxu0 0.0
  %168 = vmatpush1.msra.mxu0 0.0
  %169 = vmatprep.subr.mxu0 0.0
  %170 = vmatpush1.msra.mxu0 0.0
  %171 = vmatprep.subr.mxu0 0.0
  %172 = vmatpush1.msra.mxu0 0.0
  %173 = vmatprep.subr.mxu0 0.0
  %174 = vmatpush1.msra.mxu0 0.0
  %175 = vmatprep.mubr.f32.mxu0 0.0
  %176 = vmatmul.mubr.f32.gmra.mrb[0].mxu0 %v60
  %v177 = vpop.f32.mrb[0].mxu0
  %v178 = vadd.f32 0.0, %v177
  %v179 = vpop.f32.mrb[0].mxu0
  %180 = vmatprep.mubr.f32.mxu0 0.0
  %181 = vmatmul.mubr.f32.gmra.mrb[0].mxu0 %v63
  %v182 = vpop.f32.mrb[0].mxu0
  %v183 = vadd.f32 0.0, %v182
  %v184 = vpop.f32.mrb[0].mxu0
  %185 = vmatprep.mubr.f32.mxu0 0.0
  %186 = vmatmul.mubr.f32.gmra.mrb[0].mxu0 %v66
  %v187 = vpop.f32.mrb[0].mxu0
  %v188 = vadd.f32 0.0, %v187
  %v189 = vpop.f32.mrb[0].mxu0
  %190 = vmatprep.mubr.f32.mxu0 0.0
  %191 = vmatmul.mubr.f32.gmra.mrb[0].mxu0 %v69
  %v192 = vpop.f32.mrb[0].mxu0
  %v193 = vadd.f32 0.0, %v192
  %v194 = vpop.f32.mrb[0].mxu0
  %195 = vmatprep.mubr.f32.mxu0 0.0
  %196 = vmatmul.mubr.f32.gmra.mrb[0].mxu0 %v72
  %v197 = vpop.f32.mrb[0].mxu0
  %v198 = vadd.f32 0.0, %v197
  %v199 = vpop.f32.mrb[0].mxu0
  %200 = vmatprep.mubr.f32.mxu0 0.0
  %201 = vmatmul.mubr.f32.gmra.mrb[0].mxu0 %v75
  %v202 = vpop.f32.mrb[0].mxu0
  %v203 = vadd.f32 0.0, %v202
  %v204 = vpop.f32.mrb[0].mxu0
  %205 = vmatprep.mubr.f32.mxu0 0.0
  %206 = vmatmul.mubr.f32.gmra.mrb[0].mxu0 %v78
  %v207 = vpop.f32.mrb[0].mxu0
  %v208 = vadd.f32 0.0, %v207
  %v209 = vpop.f32.mrb[0].mxu0
  %210 = vmatprep.mubr.f32.mxu0 0.0
  %211 = vmatmul.mubr.f32.gmra.mrb[0].mxu0 %v81
  %v212 = vpop.f32.mrb[0].mxu0
  %v213 = vadd.f32 0.0, %v212
  %v214 = vpop.f32.mrb[0].mxu0
  %215 = vmatprep.mubr.f32.mxu0 0.0
  %216 = vmatmul.mubr.f32.gmra.mrb[0].mxu0 %v84
  %v217 = vpop.f32.mrb[0].mxu0
  %v218 = vadd.f32 0.0, %v217
  %v219 = vpop.f32.mrb[0].mxu0
  %220 = vmatprep.mubr.f32.mxu0 0.0
  %221 = vmatmul.mubr.f32.gmra.mrb[0].mxu0 %v87
  %v222 = vpop.f32.mrb[0].mxu0
  %v223 = vadd.f32 0.0, %v222
  %v224 = vpop.f32.mrb[0].mxu0
  %225 = vmatprep.mubr.f32.mxu0 0.0
  %226 = vmatmul.mubr.f32.gmra.mrb[0].mxu0 %v90
  %v227 = vpop.f32.mrb[0].mxu0
  %v228 = vadd.f32 0.0, %v227
  %v229 = vpop.f32.mrb[0].mxu0
  %230 = vmatprep.mubr.f32.mxu0 0.0
  %231 = vmatmul.mubr.f32.gmra.mrb[0].mxu0 %v93
  %v232 = vpop.f32.mrb[0].mxu0
  %v233 = vadd.f32 0.0, %v232
  %v234 = vpop.f32.mrb[0].mxu0
  %235 = vmatprep.mubr.f32.mxu0 0.0
  %236 = vmatmul.mubr.f32.gmra.mrb[0].mxu0 %v96
  %v237 = vpop.f32.mrb[0].mxu0
  %v238 = vadd.f32 0.0, %v237
  %v239 = vpop.f32.mrb[0].mxu0
  %240 = vmatprep.mubr.f32.mxu0 0.0
  %241 = vmatmul.mubr.f32.gmra.mrb[0].mxu0 %v99
  %v242 = vpop.f32.mrb[0].mxu0
  %v243 = vadd.f32 0.0, %v242
  %v244 = vpop.f32.mrb[0].mxu0
  %245 = vmatprep.mubr.f32.mxu0 0.0
  %246 = vmatmul.mubr.f32.gmra.mrb[0].mxu0 %v102
  %v247 = vpop.f32.mrb[0].mxu0
  %v248 = vadd.f32 0.0, %v247
  %v249 = vpop.f32.mrb[0].mxu0
  %250 = vmatprep.mubr.f32.mxu0 0.0
  %251 = vmatmul.mubr.f32.gmra.mrb[0].mxu0 %v105
  %v252 = vpop.f32.mrb[0].mxu0
  %v253 = vadd.f32 0.0, %v252
  %v254 = vpop.f32.mrb[0].mxu0
  %255 = vdwg.mxu0
  %v256 = vmul.f32 %v34, %v34
  %v257 = vmul.f32 %v35, %v35
  %v258 = vmul.f32 %v36, %v36
  %v259 = vmul.f32 %v37, %v37
  %v260 = vmul.f32 %v38, %v38
  %v261 = vmul.f32 %v39, %v39
  %v262 = vmul.f32 %v40, %v40
  %v263 = vmul.f32 %v41, %v41
  %v264 = vmul.f32 %v42, %v42
  %v265 = vmul.f32 %v43, %v43
  %v266 = vmul.f32 %v44, %v44
  %v267 = vmul.f32 %v45, %v45
  %v268 = vmul.f32 %v46, %v46
  %v269 = vmul.f32 %v47, %v47
  %v270 = vmul.f32 %v48, %v48
  %v271 = vmul.f32 %v49, %v49
  %v272 = vld [vmem:[%s3] sm:$0xff]
  %v273 = vld [vmem:[%s3 + $0x8] sm:$0xff]
  %v274 = vld [vmem:[%s3 + $0x10] sm:$0xff]
  %v275 = vld [vmem:[%s3 + $0x18] sm:$0xff]
  %v276 = vld [vmem:[%s3 + $0x20] sm:$0xff]
  %v277 = vld [vmem:[%s3 + $0x28] sm:$0x7]
  %v279 = vsel %vm58, %v256, 0
  %v282 = vsel %vm58, %v257, 0
  %v285 = vsel %vm58, %v258, 0
  %v288 = vsel %vm58, %v259, 0
  %v291 = vsel %vm58, %v260, 0
  %v294 = vsel %vm58, %v261, 0
  %v297 = vsel %vm58, %v262, 0
  %v300 = vsel %vm58, %v263, 0
  %v303 = vsel %vm58, %v264, 0
  %v306 = vsel %vm58, %v265, 0
  %v309 = vsel %vm58, %v266, 0
  %v312 = vsel %vm58, %v267, 0
  %v315 = vsel %vm58, %v268, 0
  %v318 = vsel %vm58, %v269, 0
  %v321 = vsel %vm58, %v270, 0
  %v324 = vsel %vm58, %v271, 0
  %v327 = vsel %vm107, %v277, 0
  %329 = vmatprep.subr.mxu0 0.0
  %330 = vmatpush1.msra.mxu0 %v272
  %331 = vmatprep.subr.mxu0 0.0
  %332 = vmatpush1.msra.mxu0 %v273
  %333 = vmatprep.subr.mxu0 0.0
  %334 = vmatpush1.msra.mxu0 %v274
  %335 = vmatprep.subr.mxu0 0.0
  %336 = vmatpush1.msra.mxu0 %v275
  %337 = vmatprep.subr.mxu0 0.0
  %338 = vmatpush1.msra.mxu0 %v276
  %339 = vmatprep.subr.mxu0 0.0
  %340 = vmatpush1.msra.mxu0 %v327
  %341 = vmatprep.subr.mxu0 0.0
  %342 = vmatpush1.msra.mxu0 0.0
  %343 = vmatprep.subr.mxu0 0.0
  %344 = vmatpush1.msra.mxu0 0.0
  %345 = vmatprep.subr.mxu0 0.0
  %346 = vmatpush1.msra.mxu0 0.0
  %347 = vmatprep.subr.mxu0 0.0
  %348 = vmatpush1.msra.mxu0 0.0
  %349 = vmatprep.subr.mxu0 0.0
  %350 = vmatpush1.msra.mxu0 0.0
  %351 = vmatprep.subr.mxu0 0.0
  %352 = vmatpush1.msra.mxu0 0.0
  %353 = vmatprep.subr.mxu0 0.0
  %354 = vmatpush1.msra.mxu0 0.0
  %355 = vmatprep.subr.mxu0 0.0
  %356 = vmatpush1.msra.mxu0 0.0
  %357 = vmatprep.subr.mxu0 0.0
  %358 = vmatpush1.msra.mxu0 0.0
  %359 = vmatprep.subr.mxu0 0.0
  %360 = vmatpush1.msra.mxu0 0.0
  %361 = vmatprep.subr.mxu0 0.0
  %362 = vmatpush1.msra.mxu0 0.0
  %363 = vmatprep.subr.mxu0 0.0
  %364 = vmatpush1.msra.mxu0 0.0
  %365 = vmatprep.subr.mxu0 0.0
  %366 = vmatpush1.msra.mxu0 0.0
  %367 = vmatprep.subr.mxu0 0.0
  %368 = vmatpush1.msra.mxu0 0.0
  %369 = vmatprep.subr.mxu0 0.0
  %370 = vmatpush1.msra.mxu0 0.0
  %371 = vmatprep.subr.mxu0 0.0
  %372 = vmatpush1.msra.mxu0 0.0
  %373 = vmatprep.subr.mxu0 0.0
  %374 = vmatpush1.msra.mxu0 0.0
  %375 = vmatprep.subr.mxu0 0.0
  %376 = vmatpush1.msra.mxu0 0.0
  %377 = vmatprep.subr.mxu0 0.0
  %378 = vmatpush1.msra.mxu0 0.0
  %379 = vmatprep.subr.mxu0 0.0
  %380 = vmatpush1.msra.mxu0 0.0
  %381 = vmatprep.subr.mxu0 0.0
  %382 = vmatpush1.msra.mxu0 0.0
  %383 = vmatprep.subr.mxu0 0.0
  %384 = vmatpush1.msra.mxu0 0.0
  %385 = vmatprep.subr.mxu0 0.0
  %386 = vmatpush1.msra.mxu0 0.0
  %387 = vmatprep.subr.mxu0 0.0
  %388 = vmatpush1.msra.mxu0 0.0
  %389 = vmatprep.subr.mxu0 0.0
  %390 = vmatpush1.msra.mxu0 0.0
  %391 = vmatprep.subr.mxu0 0.0
  %392 = vmatpush1.msra.mxu0 0.0
  %393 = vmatprep.mubr.f32.mxu0 0.0
  %394 = vmatmul.mubr.f32.gmra.mrb[0].mxu0 %v279
  %v395 = vpop.f32.mrb[0].mxu0
  %v396 = vadd.f32 0.0, %v395
  %v397 = vpop.f32.mrb[0].mxu0
  %398 = vmatprep.mubr.f32.mxu0 0.0
  %399 = vmatmul.mubr.f32.gmra.mrb[0].mxu0 %v282
  %v400 = vpop.f32.mrb[0].mxu0
  %v401 = vadd.f32 0.0, %v400
  %v402 = vpop.f32.mrb[0].mxu0
  %403 = vmatprep.mubr.f32.mxu0 0.0
  %404 = vmatmul.mubr.f32.gmra.mrb[0].mxu0 %v285
  %v405 = vpop.f32.mrb[0].mxu0
  %v406 = vadd.f32 0.0, %v405
  %v407 = vpop.f32.mrb[0].mxu0
  %408 = vmatprep.mubr.f32.mxu0 0.0
  %409 = vmatmul.mubr.f32.gmra.mrb[0].mxu0 %v288
  %v410 = vpop.f32.mrb[0].mxu0
  %v411 = vadd.f32 0.0, %v410
  %v412 = vpop.f32.mrb[0].mxu0
  %413 = vmatprep.mubr.f32.mxu0 0.0
  %414 = vmatmul.mubr.f32.gmra.mrb[0].mxu0 %v291
  %v415 = vpop.f32.mrb[0].mxu0
  %v416 = vadd.f32 0.0, %v415
  %v417 = vpop.f32.mrb[0].mxu0
  %418 = vmatprep.mubr.f32.mxu0 0.0
  %419 = vmatmul.mubr.f32.gmra.mrb[0].mxu0 %v294
  %v420 = vpop.f32.mrb[0].mxu0
  %v421 = vadd.f32 0.0, %v420
  %v422 = vpop.f32.mrb[0].mxu0
  %423 = vmatprep.mubr.f32.mxu0 0.0
  %424 = vmatmul.mubr.f32.gmra.mrb[0].mxu0 %v297
  %v425 = vpop.f32.mrb[0].mxu0
  %v426 = vadd.f32 0.0, %v425
  %v427 = vpop.f32.mrb[0].mxu0
  %428 = vmatprep.mubr.f32.mxu0 0.0
  %429 = vmatmul.mubr.f32.gmra.mrb[0].mxu0 %v300
  %v430 = vpop.f32.mrb[0].mxu0
  %v431 = vadd.f32 0.0, %v430
  %v432 = vpop.f32.mrb[0].mxu0
  %433 = vmatprep.mubr.f32.mxu0 0.0
  %434 = vmatmul.mubr.f32.gmra.mrb[0].mxu0 %v303
  %v435 = vpop.f32.mrb[0].mxu0
  %v436 = vadd.f32 0.0, %v435
  %v437 = vpop.f32.mrb[0].mxu0
  %438 = vmatprep.mubr.f32.mxu0 0.0
  %439 = vmatmul.mubr.f32.gmra.mrb[0].mxu0 %v306
  %v440 = vpop.f32.mrb[0].mxu0
  %v441 = vadd.f32 0.0, %v440
  %v442 = vpop.f32.mrb[0].mxu0
  %443 = vmatprep.mubr.f32.mxu0 0.0
  %444 = vmatmul.mubr.f32.gmra.mrb[0].mxu0 %v309
  %v445 = vpop.f32.mrb[0].mxu0
  %v446 = vadd.f32 0.0, %v445
  %v447 = vpop.f32.mrb[0].mxu0
  %448 = vmatprep.mubr.f32.mxu0 0.0
  %449 = vmatmul.mubr.f32.gmra.mrb[0].mxu0 %v312
  %v450 = vpop.f32.mrb[0].mxu0
  %v451 = vadd.f32 0.0, %v450
  %v452 = vpop.f32.mrb[0].mxu0
  %453 = vmatprep.mubr.f32.mxu0 0.0
  %454 = vmatmul.mubr.f32.gmra.mrb[0].mxu0 %v315
  %v455 = vpop.f32.mrb[0].mxu0
  %v456 = vadd.f32 0.0, %v455
  %v457 = vpop.f32.mrb[0].mxu0
  %458 = vmatprep.mubr.f32.mxu0 0.0
  %459 = vmatmul.mubr.f32.gmra.mrb[0].mxu0 %v318
  %v460 = vpop.f32.mrb[0].mxu0
  %v461 = vadd.f32 0.0, %v460
  %v462 = vpop.f32.mrb[0].mxu0
  %463 = vmatprep.mubr.f32.mxu0 0.0
  %464 = vmatmul.mubr.f32.gmra.mrb[0].mxu0 %v321
  %v465 = vpop.f32.mrb[0].mxu0
  %v466 = vadd.f32 0.0, %v465
  %v467 = vpop.f32.mrb[0].mxu0
  %468 = vmatprep.mubr.f32.mxu0 0.0
  %469 = vmatmul.mubr.f32.gmra.mrb[0].mxu0 %v324
  %v470 = vpop.f32.mrb[0].mxu0
  %v471 = vadd.f32 0.0, %v470
  %v472 = vpop.f32.mrb[0].mxu0
  %473 = vdwg.mxu0
  %v474 = vmul.f32 %v178, %v178
  %v475 = vmul.f32 %v183, %v183
  %v476 = vmul.f32 %v188, %v188
  %v477 = vmul.f32 %v193, %v193
  %v478 = vmul.f32 %v198, %v198
  %v479 = vmul.f32 %v203, %v203
  %v480 = vmul.f32 %v208, %v208
  %v481 = vmul.f32 %v213, %v213
  %v482 = vmul.f32 %v218, %v218
  %v483 = vmul.f32 %v223, %v223
  %v484 = vmul.f32 %v228, %v228
  %v485 = vmul.f32 %v233, %v233
  %v486 = vmul.f32 %v238, %v238
  %v487 = vmul.f32 %v243, %v243
  %v488 = vmul.f32 %v248, %v248
  %v489 = vmul.f32 %v253, %v253
  %506 = vrot.lane.b32.xlu0 %v474, 63
  %v507 = vpop.permute.xlu0 %506
  %508 = vrot.lane.b32.xlu0 %v475, 63
  %v509 = vpop.permute.xlu0 %508
  %510 = vrot.lane.b32.xlu0 %v476, 63
  %v511 = vpop.permute.xlu0 %510
  %512 = vrot.lane.b32.xlu0 %v477, 63
  %v513 = vpop.permute.xlu0 %512
  %514 = vrot.lane.b32.xlu0 %v478, 63
  %v515 = vpop.permute.xlu0 %514
  %516 = vrot.lane.b32.xlu0 %v479, 63
  %v517 = vpop.permute.xlu0 %516
  %518 = vrot.lane.b32.xlu0 %v480, 63
  %v519 = vpop.permute.xlu0 %518
  %520 = vrot.lane.b32.xlu0 %v481, 63
  %v521 = vpop.permute.xlu0 %520
  %522 = vrot.lane.b32.xlu0 %v482, 63
  %v523 = vpop.permute.xlu0 %522
  %524 = vrot.lane.b32.xlu0 %v483, 63
  %v525 = vpop.permute.xlu0 %524
  %526 = vrot.lane.b32.xlu0 %v484, 63
  %v527 = vpop.permute.xlu0 %526
  %528 = vrot.lane.b32.xlu0 %v485, 63
  %v529 = vpop.permute.xlu0 %528
  %530 = vrot.lane.b32.xlu0 %v486, 63
  %v531 = vpop.permute.xlu0 %530
  %532 = vrot.lane.b32.xlu0 %v487, 63
  %v533 = vpop.permute.xlu0 %532
  %534 = vrot.lane.b32.xlu0 %v488, 63
  %v535 = vpop.permute.xlu0 %534
  %536 = vrot.lane.b32.xlu0 %v489, 63
  %v537 = vpop.permute.xlu0 %536
  %vm554 = vcmask 64512
  %v555 = vsel %vm554, %v507, 0.0
  %556 = vadd.xlane.f32.xlu0 %v555
  %v557 = vpop.xlane.xlu0 %556
  %v558 = vsel %vm554, %v509, 0.0
  %559 = vadd.xlane.f32.xlu0 %v558
  %v560 = vpop.xlane.xlu0 %559
  %v561 = vsel %vm554, %v511, 0.0
  %562 = vadd.xlane.f32.xlu0 %v561
  %v563 = vpop.xlane.xlu0 %562
  %v564 = vsel %vm554, %v513, 0.0
  %565 = vadd.xlane.f32.xlu0 %v564
  %v566 = vpop.xlane.xlu0 %565
  %v567 = vsel %vm554, %v515, 0.0
  %568 = vadd.xlane.f32.xlu0 %v567
  %v569 = vpop.xlane.xlu0 %568
  %v570 = vsel %vm554, %v517, 0.0
  %571 = vadd.xlane.f32.xlu0 %v570
  %v572 = vpop.xlane.xlu0 %571
  %v573 = vsel %vm554, %v519, 0.0
  %574 = vadd.xlane.f32.xlu0 %v573
  %v575 = vpop.xlane.xlu0 %574
  %v576 = vsel %vm554, %v521, 0.0
  %577 = vadd.xlane.f32.xlu0 %v576
  %v578 = vpop.xlane.xlu0 %577
  %v579 = vsel %vm554, %v523, 0.0
  %580 = vadd.xlane.f32.xlu0 %v579
  %v581 = vpop.xlane.xlu0 %580
  %v582 = vsel %vm554, %v525, 0.0
  %583 = vadd.xlane.f32.xlu0 %v582
  %v584 = vpop.xlane.xlu0 %583
  %v585 = vsel %vm554, %v527, 0.0
  %586 = vadd.xlane.f32.xlu0 %v585
  %v587 = vpop.xlane.xlu0 %586
  %v588 = vsel %vm554, %v529, 0.0
  %589 = vadd.xlane.f32.xlu0 %v588
  %v590 = vpop.xlane.xlu0 %589
  %v591 = vsel %vm554, %v531, 0.0
  %592 = vadd.xlane.f32.xlu0 %v591
  %v593 = vpop.xlane.xlu0 %592
  %v594 = vsel %vm554, %v533, 0.0
  %595 = vadd.xlane.f32.xlu0 %v594
  %v596 = vpop.xlane.xlu0 %595
  %v597 = vsel %vm554, %v535, 0.0
  %598 = vadd.xlane.f32.xlu0 %v597
  %v599 = vpop.xlane.xlu0 %598
  %v600 = vsel %vm554, %v537, 0.0
  %601 = vadd.xlane.f32.xlu0 %v600
  %v602 = vpop.xlane.xlu0 %601
  %v603 = vsel %vm554, %v396, 0.0
  %604 = vadd.xlane.f32.xlu0 %v603
  %v605 = vpop.xlane.xlu0 %604
  %v606 = vsel %vm554, %v401, 0.0
  %607 = vadd.xlane.f32.xlu0 %v606
  %v608 = vpop.xlane.xlu0 %607
  %v609 = vsel %vm554, %v406, 0.0
  %610 = vadd.xlane.f32.xlu0 %v609
  %v611 = vpop.xlane.xlu0 %610
  %v612 = vsel %vm554, %v411, 0.0
  %613 = vadd.xlane.f32.xlu0 %v612
  %v614 = vpop.xlane.xlu0 %613
  %v615 = vsel %vm554, %v416, 0.0
  %616 = vadd.xlane.f32.xlu0 %v615
  %v617 = vpop.xlane.xlu0 %616
  %v618 = vsel %vm554, %v421, 0.0
  %619 = vadd.xlane.f32.xlu0 %v618
  %v620 = vpop.xlane.xlu0 %619
  %v621 = vsel %vm554, %v426, 0.0
  %622 = vadd.xlane.f32.xlu0 %v621
  %v623 = vpop.xlane.xlu0 %622
  %v624 = vsel %vm554, %v431, 0.0
  %625 = vadd.xlane.f32.xlu0 %v624
  %v626 = vpop.xlane.xlu0 %625
  %v627 = vsel %vm554, %v436, 0.0
  %628 = vadd.xlane.f32.xlu0 %v627
  %v629 = vpop.xlane.xlu0 %628
  %v630 = vsel %vm554, %v441, 0.0
  %631 = vadd.xlane.f32.xlu0 %v630
  %v632 = vpop.xlane.xlu0 %631
  %v633 = vsel %vm554, %v446, 0.0
  %634 = vadd.xlane.f32.xlu0 %v633
  %v635 = vpop.xlane.xlu0 %634
  %v636 = vsel %vm554, %v451, 0.0
  %637 = vadd.xlane.f32.xlu0 %v636
  %v638 = vpop.xlane.xlu0 %637
  %v639 = vsel %vm554, %v456, 0.0
  %640 = vadd.xlane.f32.xlu0 %v639
  %v641 = vpop.xlane.xlu0 %640
  %v642 = vsel %vm554, %v461, 0.0
  %643 = vadd.xlane.f32.xlu0 %v642
  %v644 = vpop.xlane.xlu0 %643
  %v645 = vsel %vm554, %v466, 0.0
  %646 = vadd.xlane.f32.xlu0 %v645
  %v647 = vpop.xlane.xlu0 %646
  %v648 = vsel %vm554, %v471, 0.0
  %649 = vadd.xlane.f32.xlu0 %v648
  %v650 = vpop.xlane.xlu0 %649
  %v651 = vsub.f32 %v557, %v605
  %v652 = vsub.f32 %v560, %v608
  %v653 = vsub.f32 %v563, %v611
  %v654 = vsub.f32 %v566, %v614
  %v655 = vsub.f32 %v569, %v617
  %v656 = vsub.f32 %v572, %v620
  %v657 = vsub.f32 %v575, %v623
  %v658 = vsub.f32 %v578, %v626
  %v659 = vsub.f32 %v581, %v629
  %v660 = vsub.f32 %v584, %v632
  %v661 = vsub.f32 %v587, %v635
  %v662 = vsub.f32 %v590, %v638
  %v663 = vsub.f32 %v593, %v641
  %v664 = vsub.f32 %v596, %v644
  %v665 = vsub.f32 %v599, %v647
  %v666 = vsub.f32 %v602, %v650
  %v667 = vmul.f32 %v651, 0.5
  %v668 = vmul.f32 %v652, 0.5
  %v669 = vmul.f32 %v653, 0.5
  %v670 = vmul.f32 %v654, 0.5
  %v671 = vmul.f32 %v655, 0.5
  %v672 = vmul.f32 %v656, 0.5
  %v673 = vmul.f32 %v657, 0.5
  %v674 = vmul.f32 %v658, 0.5
  %v675 = vmul.f32 %v659, 0.5
  %v676 = vmul.f32 %v660, 0.5
  %v677 = vmul.f32 %v661, 0.5
  %v678 = vmul.f32 %v662, 0.5
  %v679 = vmul.f32 %v663, 0.5
  %v680 = vmul.f32 %v664, 0.5
  %v681 = vmul.f32 %v665, 0.5
  %v682 = vmul.f32 %v666, 0.5
  %v683 = vstv %s50
  %v684 = vadd.f32 %v683, %v178
  %v685 = vadd.f32 %v683, %v183
  %v686 = vadd.f32 %v683, %v188
  %v687 = vadd.f32 %v683, %v193
  %v688 = vadd.f32 %v683, %v198
  %v689 = vadd.f32 %v683, %v203
  %v690 = vadd.f32 %v683, %v208
  %v691 = vadd.f32 %v683, %v213
  %v692 = vadd.f32 %v683, %v218
  %v693 = vadd.f32 %v683, %v223
  %v694 = vadd.f32 %v683, %v228
  %v695 = vadd.f32 %v683, %v233
  %v696 = vadd.f32 %v683, %v238
  %v697 = vadd.f32 %v683, %v243
  %v698 = vadd.f32 %v683, %v248
  %v699 = vadd.f32 %v683, %v253
  %v700 = vadd.f32 %v684, %v667
  %v701 = vadd.f32 %v685, %v668
  %v702 = vadd.f32 %v686, %v669
  %v703 = vadd.f32 %v687, %v670
  %v704 = vadd.f32 %v688, %v671
  %v705 = vadd.f32 %v689, %v672
  %v706 = vadd.f32 %v690, %v673
  %v707 = vadd.f32 %v691, %v674
  %v708 = vadd.f32 %v692, %v675
  %v709 = vadd.f32 %v693, %v676
  %v710 = vadd.f32 %v694, %v677
  %v711 = vadd.f32 %v695, %v678
  %v712 = vadd.f32 %v696, %v679
  %v713 = vadd.f32 %v697, %v680
  %v714 = vadd.f32 %v698, %v681
  %v715 = vadd.f32 %v699, %v682
  %v716 = vld [vmem:[%s4] sm:$0x1]
  %v718 = vlaneseq
  %v719 = vshrl.u32 %v718, 7
  %v720 = vsub.s32 0, %v719
  %v721 = vrot.slane %v716, %v720
  %v723 = vadd.f32 %v178, %v721
  %v724 = vadd.f32 %v183, %v721
  %v725 = vadd.f32 %v188, %v721
  %v726 = vadd.f32 %v193, %v721
  %v727 = vadd.f32 %v198, %v721
  %v728 = vadd.f32 %v203, %v721
  %v729 = vadd.f32 %v208, %v721
  %v730 = vadd.f32 %v213, %v721
  %v731 = vadd.f32 %v218, %v721
  %v732 = vadd.f32 %v223, %v721
  %v733 = vadd.f32 %v228, %v721
  %v734 = vadd.f32 %v233, %v721
  %v735 = vadd.f32 %v238, %v721
  %v736 = vadd.f32 %v243, %v721
  %v737 = vadd.f32 %v248, %v721
  %v738 = vadd.f32 %v253, %v721
  %v739 = vmax.f32 %v723, 0.0
  %v740 = vmax.f32 %v724, 0.0
  %v741 = vmax.f32 %v725, 0.0
  %v742 = vmax.f32 %v726, 0.0
  %v743 = vmax.f32 %v727, 0.0
  %v744 = vmax.f32 %v728, 0.0
  %v745 = vmax.f32 %v729, 0.0
  %v746 = vmax.f32 %v730, 0.0
  %v747 = vmax.f32 %v731, 0.0
  %v748 = vmax.f32 %v732, 0.0
  %v749 = vmax.f32 %v733, 0.0
  %v750 = vmax.f32 %v734, 0.0
  %v751 = vmax.f32 %v735, 0.0
  %v752 = vmax.f32 %v736, 0.0
  %v753 = vmax.f32 %v737, 0.0
  %v754 = vmax.f32 %v738, 0.0
  %v755 = vld [vmem:[%s5] sm:$0xff]
  %v756 = vld [vmem:[%s5 + $0x8] sm:$0xff]
  %v757 = vld [vmem:[%s5 + $0x10] sm:$0xff]
  %v758 = vld [vmem:[%s5 + $0x18] sm:$0xff]
  %v759 = vld [vmem:[%s5 + $0x20] sm:$0xff]
  %v760 = vld [vmem:[%s5 + $0x28] sm:$0xff]
  %v761 = vld [vmem:[%s5 + $0x30] sm:$0xff]
  %v762 = vld [vmem:[%s5 + $0x38] sm:$0xff]
  %v763 = vld [vmem:[%s6] sm:$0x1]
  %v765 = vlaneseq
  %v766 = vshrl.u32 %v765, 7
  %v767 = vsub.s32 0, %v766
  %v768 = vrot.slane %v763, %v767
  %vm770 = vcmask 523264
  %v772 = vsel %vm770, %v739, 0
  %v775 = vsel %vm770, %v740, 0
  %v778 = vsel %vm770, %v741, 0
  %v781 = vsel %vm770, %v742, 0
  %v784 = vsel %vm770, %v743, 0
  %v787 = vsel %vm770, %v744, 0
  %v790 = vsel %vm770, %v745, 0
  %v793 = vsel %vm770, %v746, 0
  %v796 = vsel %vm770, %v747, 0
  %v799 = vsel %vm770, %v748, 0
  %v802 = vsel %vm770, %v749, 0
  %v805 = vsel %vm770, %v750, 0
  %v808 = vsel %vm770, %v751, 0
  %v811 = vsel %vm770, %v752, 0
  %v814 = vsel %vm770, %v753, 0
  %v817 = vsel %vm770, %v754, 0
  %819 = vmatprep.subr.mxu0 0.0
  %820 = vmatpush1.msra.mxu0 %v755
  %821 = vmatprep.subr.mxu0 0.0
  %822 = vmatpush1.msra.mxu0 %v756
  %823 = vmatprep.subr.mxu0 0.0
  %824 = vmatpush1.msra.mxu0 %v757
  %825 = vmatprep.subr.mxu0 0.0
  %826 = vmatpush1.msra.mxu0 %v758
  %827 = vmatprep.subr.mxu0 0.0
  %828 = vmatpush1.msra.mxu0 %v759
  %829 = vmatprep.subr.mxu0 0.0
  %830 = vmatpush1.msra.mxu0 %v760
  %831 = vmatprep.subr.mxu0 0.0
  %832 = vmatpush1.msra.mxu0 %v761
  %833 = vmatprep.subr.mxu0 0.0
  %834 = vmatpush1.msra.mxu0 %v762
  %835 = vmatprep.subr.mxu0 0.0
  %836 = vmatpush1.msra.mxu0 0.0
  %837 = vmatprep.subr.mxu0 0.0
  %838 = vmatpush1.msra.mxu0 0.0
  %839 = vmatprep.subr.mxu0 0.0
  %840 = vmatpush1.msra.mxu0 0.0
  %841 = vmatprep.subr.mxu0 0.0
  %842 = vmatpush1.msra.mxu0 0.0
  %843 = vmatprep.subr.mxu0 0.0
  %844 = vmatpush1.msra.mxu0 0.0
  %845 = vmatprep.subr.mxu0 0.0
  %846 = vmatpush1.msra.mxu0 0.0
  %847 = vmatprep.subr.mxu0 0.0
  %848 = vmatpush1.msra.mxu0 0.0
  %849 = vmatprep.subr.mxu0 0.0
  %850 = vmatpush1.msra.mxu0 0.0
  %851 = vmatprep.subr.mxu0 0.0
  %852 = vmatpush1.msra.mxu0 0.0
  %853 = vmatprep.subr.mxu0 0.0
  %854 = vmatpush1.msra.mxu0 0.0
  %855 = vmatprep.subr.mxu0 0.0
  %856 = vmatpush1.msra.mxu0 0.0
  %857 = vmatprep.subr.mxu0 0.0
  %858 = vmatpush1.msra.mxu0 0.0
  %859 = vmatprep.subr.mxu0 0.0
  %860 = vmatpush1.msra.mxu0 0.0
  %861 = vmatprep.subr.mxu0 0.0
  %862 = vmatpush1.msra.mxu0 0.0
  %863 = vmatprep.subr.mxu0 0.0
  %864 = vmatpush1.msra.mxu0 0.0
  %865 = vmatprep.subr.mxu0 0.0
  %866 = vmatpush1.msra.mxu0 0.0
  %867 = vmatprep.subr.mxu0 0.0
  %868 = vmatpush1.msra.mxu0 0.0
  %869 = vmatprep.subr.mxu0 0.0
  %870 = vmatpush1.msra.mxu0 0.0
  %871 = vmatprep.subr.mxu0 0.0
  %872 = vmatpush1.msra.mxu0 0.0
  %873 = vmatprep.subr.mxu0 0.0
  %874 = vmatpush1.msra.mxu0 0.0
  %875 = vmatprep.subr.mxu0 0.0
  %876 = vmatpush1.msra.mxu0 0.0
  %877 = vmatprep.subr.mxu0 0.0
  %878 = vmatpush1.msra.mxu0 0.0
  %879 = vmatprep.subr.mxu0 0.0
  %880 = vmatpush1.msra.mxu0 0.0
  %881 = vmatprep.subr.mxu0 0.0
  %882 = vmatpush1.msra.mxu0 0.0
  %883 = vmatprep.mubr.f32.mxu0 0.0
  %884 = vmatmul.mubr.f32.gmra.mrb[0].mxu0 %v772
  %v885 = vpop.f32.mrb[0].mxu0
  %v886 = vadd.f32 %v768, %v885
  %v887 = vpop.f32.mrb[0].mxu0
  %888 = vmatprep.mubr.f32.mxu0 0.0
  %889 = vmatmul.mubr.f32.gmra.mrb[0].mxu0 %v775
  %v890 = vpop.f32.mrb[0].mxu0
  %v891 = vadd.f32 %v768, %v890
  %v892 = vpop.f32.mrb[0].mxu0
  %893 = vmatprep.mubr.f32.mxu0 0.0
  %894 = vmatmul.mubr.f32.gmra.mrb[0].mxu0 %v778
  %v895 = vpop.f32.mrb[0].mxu0
  %v896 = vadd.f32 %v768, %v895
  %v897 = vpop.f32.mrb[0].mxu0
  %898 = vmatprep.mubr.f32.mxu0 0.0
  %899 = vmatmul.mubr.f32.gmra.mrb[0].mxu0 %v781
  %v900 = vpop.f32.mrb[0].mxu0
  %v901 = vadd.f32 %v768, %v900
  %v902 = vpop.f32.mrb[0].mxu0
  %903 = vmatprep.mubr.f32.mxu0 0.0
  %904 = vmatmul.mubr.f32.gmra.mrb[0].mxu0 %v784
  %v905 = vpop.f32.mrb[0].mxu0
  %v906 = vadd.f32 %v768, %v905
  %v907 = vpop.f32.mrb[0].mxu0
  %908 = vmatprep.mubr.f32.mxu0 0.0
  %909 = vmatmul.mubr.f32.gmra.mrb[0].mxu0 %v787
  %v910 = vpop.f32.mrb[0].mxu0
  %v911 = vadd.f32 %v768, %v910
  %v912 = vpop.f32.mrb[0].mxu0
  %913 = vmatprep.mubr.f32.mxu0 0.0
  %914 = vmatmul.mubr.f32.gmra.mrb[0].mxu0 %v790
  %v915 = vpop.f32.mrb[0].mxu0
  %v916 = vadd.f32 %v768, %v915
  %v917 = vpop.f32.mrb[0].mxu0
  %918 = vmatprep.mubr.f32.mxu0 0.0
  %919 = vmatmul.mubr.f32.gmra.mrb[0].mxu0 %v793
  %v920 = vpop.f32.mrb[0].mxu0
  %v921 = vadd.f32 %v768, %v920
  %v922 = vpop.f32.mrb[0].mxu0
  %923 = vmatprep.mubr.f32.mxu0 0.0
  %924 = vmatmul.mubr.f32.gmra.mrb[0].mxu0 %v796
  %v925 = vpop.f32.mrb[0].mxu0
  %v926 = vadd.f32 %v768, %v925
  %v927 = vpop.f32.mrb[0].mxu0
  %928 = vmatprep.mubr.f32.mxu0 0.0
  %929 = vmatmul.mubr.f32.gmra.mrb[0].mxu0 %v799
  %v930 = vpop.f32.mrb[0].mxu0
  %v931 = vadd.f32 %v768, %v930
  %v932 = vpop.f32.mrb[0].mxu0
  %933 = vmatprep.mubr.f32.mxu0 0.0
  %934 = vmatmul.mubr.f32.gmra.mrb[0].mxu0 %v802
  %v935 = vpop.f32.mrb[0].mxu0
  %v936 = vadd.f32 %v768, %v935
  %v937 = vpop.f32.mrb[0].mxu0
  %938 = vmatprep.mubr.f32.mxu0 0.0
  %939 = vmatmul.mubr.f32.gmra.mrb[0].mxu0 %v805
  %v940 = vpop.f32.mrb[0].mxu0
  %v941 = vadd.f32 %v768, %v940
  %v942 = vpop.f32.mrb[0].mxu0
  %943 = vmatprep.mubr.f32.mxu0 0.0
  %944 = vmatmul.mubr.f32.gmra.mrb[0].mxu0 %v808
  %v945 = vpop.f32.mrb[0].mxu0
  %v946 = vadd.f32 %v768, %v945
  %v947 = vpop.f32.mrb[0].mxu0
  %948 = vmatprep.mubr.f32.mxu0 0.0
  %949 = vmatmul.mubr.f32.gmra.mrb[0].mxu0 %v811
  %v950 = vpop.f32.mrb[0].mxu0
  %v951 = vadd.f32 %v768, %v950
  %v952 = vpop.f32.mrb[0].mxu0
  %953 = vmatprep.mubr.f32.mxu0 0.0
  %954 = vmatmul.mubr.f32.gmra.mrb[0].mxu0 %v814
  %v955 = vpop.f32.mrb[0].mxu0
  %v956 = vadd.f32 %v768, %v955
  %v957 = vpop.f32.mrb[0].mxu0
  %958 = vmatprep.mubr.f32.mxu0 0.0
  %959 = vmatmul.mubr.f32.gmra.mrb[0].mxu0 %v817
  %v960 = vpop.f32.mrb[0].mxu0
  %v961 = vadd.f32 %v768, %v960
  %v962 = vpop.f32.mrb[0].mxu0
  %963 = vdwg.mxu0
  %v964 = vmax.f32 %v886, 0.0
  %v965 = vmax.f32 %v891, 0.0
  %v966 = vmax.f32 %v896, 0.0
  %v967 = vmax.f32 %v901, 0.0
  %v968 = vmax.f32 %v906, 0.0
  %v969 = vmax.f32 %v911, 0.0
  %v970 = vmax.f32 %v916, 0.0
  %v971 = vmax.f32 %v921, 0.0
  %v972 = vmax.f32 %v926, 0.0
  %v973 = vmax.f32 %v931, 0.0
  %v974 = vmax.f32 %v936, 0.0
  %v975 = vmax.f32 %v941, 0.0
  %v976 = vmax.f32 %v946, 0.0
  %v977 = vmax.f32 %v951, 0.0
  %v978 = vmax.f32 %v956, 0.0
  %v979 = vmax.f32 %v961, 0.0
  %v980 = vld [vmem:[%s7] sm:$0x1]
  %v982 = vlaneseq
  %v983 = vshrl.u32 %v982, 7
  %v984 = vsub.s32 0, %v983
  %v985 = vrot.slane %v980, %v984
  %v987 = vmul.f32 %v964, %v985
  %v988 = vmul.f32 %v965, %v985
  %v989 = vmul.f32 %v966, %v985
  %v990 = vmul.f32 %v967, %v985
  %v991 = vmul.f32 %v968, %v985
  %v992 = vmul.f32 %v969, %v985
  %v993 = vmul.f32 %v970, %v985
  %v994 = vmul.f32 %v971, %v985
  %v995 = vmul.f32 %v972, %v985
  %v996 = vmul.f32 %v973, %v985
  %v997 = vmul.f32 %v974, %v985
  %v998 = vmul.f32 %v975, %v985
  %v999 = vmul.f32 %v976, %v985
  %v1000 = vmul.f32 %v977, %v985
  %v1001 = vmul.f32 %v978, %v985
  %v1002 = vmul.f32 %v979, %v985
  %vm1003 = vcmask 261120
  %v1004 = vsel %vm1003, %v987, 0.0
  %1005 = vadd.xlane.f32.xlu0 %v1004
  %v1006 = vpop.xlane.xlu0 %1005
  %v1007 = vsel %vm1003, %v988, 0.0
  %1008 = vadd.xlane.f32.xlu0 %v1007
  %v1009 = vpop.xlane.xlu0 %1008
  %v1010 = vsel %vm1003, %v989, 0.0
  %1011 = vadd.xlane.f32.xlu0 %v1010
  %v1012 = vpop.xlane.xlu0 %1011
  %v1013 = vsel %vm1003, %v990, 0.0
  %1014 = vadd.xlane.f32.xlu0 %v1013
  %v1015 = vpop.xlane.xlu0 %1014
  %v1016 = vsel %vm1003, %v991, 0.0
  %1017 = vadd.xlane.f32.xlu0 %v1016
  %v1018 = vpop.xlane.xlu0 %1017
  %v1019 = vsel %vm1003, %v992, 0.0
  %1020 = vadd.xlane.f32.xlu0 %v1019
  %v1021 = vpop.xlane.xlu0 %1020
  %v1022 = vsel %vm1003, %v993, 0.0
  %1023 = vadd.xlane.f32.xlu0 %v1022
  %v1024 = vpop.xlane.xlu0 %1023
  %v1025 = vsel %vm1003, %v994, 0.0
  %1026 = vadd.xlane.f32.xlu0 %v1025
  %v1027 = vpop.xlane.xlu0 %1026
  %v1028 = vsel %vm1003, %v995, 0.0
  %1029 = vadd.xlane.f32.xlu0 %v1028
  %v1030 = vpop.xlane.xlu0 %1029
  %v1031 = vsel %vm1003, %v996, 0.0
  %1032 = vadd.xlane.f32.xlu0 %v1031
  %v1033 = vpop.xlane.xlu0 %1032
  %v1034 = vsel %vm1003, %v997, 0.0
  %1035 = vadd.xlane.f32.xlu0 %v1034
  %v1036 = vpop.xlane.xlu0 %1035
  %v1037 = vsel %vm1003, %v998, 0.0
  %1038 = vadd.xlane.f32.xlu0 %v1037
  %v1039 = vpop.xlane.xlu0 %1038
  %v1040 = vsel %vm1003, %v999, 0.0
  %1041 = vadd.xlane.f32.xlu0 %v1040
  %v1042 = vpop.xlane.xlu0 %1041
  %v1043 = vsel %vm1003, %v1000, 0.0
  %1044 = vadd.xlane.f32.xlu0 %v1043
  %v1045 = vpop.xlane.xlu0 %1044
  %v1046 = vsel %vm1003, %v1001, 0.0
  %1047 = vadd.xlane.f32.xlu0 %v1046
  %v1048 = vpop.xlane.xlu0 %1047
  %v1049 = vsel %vm1003, %v1002, 0.0
  %1050 = vadd.xlane.f32.xlu0 %v1049
  %v1051 = vpop.xlane.xlu0 %1050
  %v1052 = vstv %s51
  %v1053 = vadd.f32 %v1006, %v1052
  %v1054 = vadd.f32 %v1009, %v1052
  %v1055 = vadd.f32 %v1012, %v1052
  %v1056 = vadd.f32 %v1015, %v1052
  %v1057 = vadd.f32 %v1018, %v1052
  %v1058 = vadd.f32 %v1021, %v1052
  %v1059 = vadd.f32 %v1024, %v1052
  %v1060 = vadd.f32 %v1027, %v1052
  %v1061 = vadd.f32 %v1030, %v1052
  %v1062 = vadd.f32 %v1033, %v1052
  %v1063 = vadd.f32 %v1036, %v1052
  %v1064 = vadd.f32 %v1039, %v1052
  %v1065 = vadd.f32 %v1042, %v1052
  %v1066 = vadd.f32 %v1045, %v1052
  %v1067 = vadd.f32 %v1048, %v1052
  %v1068 = vadd.f32 %v1051, %v1052
  %v1069 = vadd.f32 %v700, %v1053
  %v1070 = vadd.f32 %v701, %v1054
  %v1071 = vadd.f32 %v702, %v1055
  %v1072 = vadd.f32 %v703, %v1056
  %v1073 = vadd.f32 %v704, %v1057
  %v1074 = vadd.f32 %v705, %v1058
  %v1075 = vadd.f32 %v706, %v1059
  %v1076 = vadd.f32 %v707, %v1060
  %v1077 = vadd.f32 %v708, %v1061
  %v1078 = vadd.f32 %v709, %v1062
  %v1079 = vadd.f32 %v710, %v1063
  %v1080 = vadd.f32 %v711, %v1064
  %v1081 = vadd.f32 %v712, %v1065
  %v1082 = vadd.f32 %v713, %v1066
  %v1083 = vadd.f32 %v714, %v1067
  %v1084 = vadd.f32 %v715, %v1068
  %v1085 = vxor.u32 %v1069, 2147483648
  %v1086 = vxor.u32 %v1070, 2147483648
  %v1087 = vxor.u32 %v1071, 2147483648
  %v1088 = vxor.u32 %v1072, 2147483648
  %v1089 = vxor.u32 %v1073, 2147483648
  %v1090 = vxor.u32 %v1074, 2147483648
  %v1091 = vxor.u32 %v1075, 2147483648
  %v1092 = vxor.u32 %v1076, 2147483648
  %v1093 = vxor.u32 %v1077, 2147483648
  %v1094 = vxor.u32 %v1078, 2147483648
  %v1095 = vxor.u32 %v1079, 2147483648
  %v1096 = vxor.u32 %v1080, 2147483648
  %v1097 = vxor.u32 %v1081, 2147483648
  %v1098 = vxor.u32 %v1082, 2147483648
  %v1099 = vxor.u32 %v1083, 2147483648
  %v1100 = vxor.u32 %v1084, 2147483648
  %v1101 = vmul.f32 %v1085, 1.442695
  %v1102 = vpow.pop %v1101
  %v1103 = vmul.f32 %v1086, 1.442695
  %v1104 = vpow.pop %v1103
  %v1105 = vmul.f32 %v1087, 1.442695
  %v1106 = vpow.pop %v1105
  %v1107 = vmul.f32 %v1088, 1.442695
  %v1108 = vpow.pop %v1107
  %v1109 = vmul.f32 %v1089, 1.442695
  %v1110 = vpow.pop %v1109
  %v1111 = vmul.f32 %v1090, 1.442695
  %v1112 = vpow.pop %v1111
  %v1113 = vmul.f32 %v1091, 1.442695
  %v1114 = vpow.pop %v1113
  %v1115 = vmul.f32 %v1092, 1.442695
  %v1116 = vpow.pop %v1115
  %v1117 = vmul.f32 %v1093, 1.442695
  %v1118 = vpow.pop %v1117
  %v1119 = vmul.f32 %v1094, 1.442695
  %v1120 = vpow.pop %v1119
  %v1121 = vmul.f32 %v1095, 1.442695
  %v1122 = vpow.pop %v1121
  %v1123 = vmul.f32 %v1096, 1.442695
  %v1124 = vpow.pop %v1123
  %v1125 = vmul.f32 %v1097, 1.442695
  %v1126 = vpow.pop %v1125
  %v1127 = vmul.f32 %v1098, 1.442695
  %v1128 = vpow.pop %v1127
  %v1129 = vmul.f32 %v1099, 1.442695
  %v1130 = vpow.pop %v1129
  %v1131 = vmul.f32 %v1100, 1.442695
  %v1132 = vpow.pop %v1131
  %v1133 = vadd.f32 %v1102, 1.0
  %v1134 = vadd.f32 %v1104, 1.0
  %v1135 = vadd.f32 %v1106, 1.0
  %v1136 = vadd.f32 %v1108, 1.0
  %v1137 = vadd.f32 %v1110, 1.0
  %v1138 = vadd.f32 %v1112, 1.0
  %v1139 = vadd.f32 %v1114, 1.0
  %v1140 = vadd.f32 %v1116, 1.0
  %v1141 = vadd.f32 %v1118, 1.0
  %v1142 = vadd.f32 %v1120, 1.0
  %v1143 = vadd.f32 %v1122, 1.0
  %v1144 = vadd.f32 %v1124, 1.0
  %v1145 = vadd.f32 %v1126, 1.0
  %v1146 = vadd.f32 %v1128, 1.0
  %v1147 = vadd.f32 %v1130, 1.0
  %v1148 = vadd.f32 %v1132, 1.0
  %v1149 = vrcp.pop %v1133
  %v1150 = vmul.f32 1.0, %v1149
  %v1151 = vrcp.pop %v1134
  %v1152 = vmul.f32 1.0, %v1151
  %v1153 = vrcp.pop %v1135
  %v1154 = vmul.f32 1.0, %v1153
  %v1155 = vrcp.pop %v1136
  %v1156 = vmul.f32 1.0, %v1155
  %v1157 = vrcp.pop %v1137
  %v1158 = vmul.f32 1.0, %v1157
  %v1159 = vrcp.pop %v1138
  %v1160 = vmul.f32 1.0, %v1159
  %v1161 = vrcp.pop %v1139
  %v1162 = vmul.f32 1.0, %v1161
  %v1163 = vrcp.pop %v1140
  %v1164 = vmul.f32 1.0, %v1163
  %v1165 = vrcp.pop %v1141
  %v1166 = vmul.f32 1.0, %v1165
  %v1167 = vrcp.pop %v1142
  %v1168 = vmul.f32 1.0, %v1167
  %v1169 = vrcp.pop %v1143
  %v1170 = vmul.f32 1.0, %v1169
  %v1171 = vrcp.pop %v1144
  %v1172 = vmul.f32 1.0, %v1171
  %v1173 = vrcp.pop %v1145
  %v1174 = vmul.f32 1.0, %v1173
  %v1175 = vrcp.pop %v1146
  %v1176 = vmul.f32 1.0, %v1175
  %v1177 = vrcp.pop %v1147
  %v1178 = vmul.f32 1.0, %v1177
  %v1179 = vrcp.pop %v1148
  %v1180 = vmul.f32 1.0, %v1179
  %1197 = vrot.lane.b32.xlu0 %v1150, 64
  %v1198 = vpop.permute.xlu0 %1197
  %1199 = vrot.lane.b32.xlu0 %v1152, 64
  %v1200 = vpop.permute.xlu0 %1199
  %1201 = vrot.lane.b32.xlu0 %v1154, 64
  %v1202 = vpop.permute.xlu0 %1201
  %1203 = vrot.lane.b32.xlu0 %v1156, 64
  %v1204 = vpop.permute.xlu0 %1203
  %1205 = vrot.lane.b32.xlu0 %v1158, 64
  %v1206 = vpop.permute.xlu0 %1205
  %1207 = vrot.lane.b32.xlu0 %v1160, 64
  %v1208 = vpop.permute.xlu0 %1207
  %1209 = vrot.lane.b32.xlu0 %v1162, 64
  %v1210 = vpop.permute.xlu0 %1209
  %1211 = vrot.lane.b32.xlu0 %v1164, 64
  %v1212 = vpop.permute.xlu0 %1211
  %1213 = vrot.lane.b32.xlu0 %v1166, 64
  %v1214 = vpop.permute.xlu0 %1213
  %1215 = vrot.lane.b32.xlu0 %v1168, 64
  %v1216 = vpop.permute.xlu0 %1215
  %1217 = vrot.lane.b32.xlu0 %v1170, 64
  %v1218 = vpop.permute.xlu0 %1217
  %1219 = vrot.lane.b32.xlu0 %v1172, 64
  %v1220 = vpop.permute.xlu0 %1219
  %1221 = vrot.lane.b32.xlu0 %v1174, 64
  %v1222 = vpop.permute.xlu0 %1221
  %1223 = vrot.lane.b32.xlu0 %v1176, 64
  %v1224 = vpop.permute.xlu0 %1223
  %1225 = vrot.lane.b32.xlu0 %v1178, 64
  %v1226 = vpop.permute.xlu0 %1225
  %1227 = vrot.lane.b32.xlu0 %v1180, 64
  %v1228 = vpop.permute.xlu0 %1227
  %vm1245 = vcmask 7168
  %1246 = vst.msk [vmem:[%s9] sm:$0xff] %vm1245, %v1198
  %1247 = vst.msk [vmem:[%s9 + $0x8] sm:$0xff] %vm1245, %v1200
  %1248 = vst.msk [vmem:[%s9 + $0x10] sm:$0xff] %vm1245, %v1202
  %1249 = vst.msk [vmem:[%s9 + $0x18] sm:$0xff] %vm1245, %v1204
  %1250 = vst.msk [vmem:[%s9 + $0x20] sm:$0xff] %vm1245, %v1206
  %1251 = vst.msk [vmem:[%s9 + $0x28] sm:$0xff] %vm1245, %v1208
  %1252 = vst.msk [vmem:[%s9 + $0x30] sm:$0xff] %vm1245, %v1210
  %1253 = vst.msk [vmem:[%s9 + $0x38] sm:$0xff] %vm1245, %v1212
  %1254 = vst.msk [vmem:[%s9 + $0x40] sm:$0xff] %vm1245, %v1214
  %1255 = vst.msk [vmem:[%s9 + $0x48] sm:$0xff] %vm1245, %v1216
  %1256 = vst.msk [vmem:[%s9 + $0x50] sm:$0xff] %vm1245, %v1218
  %1257 = vst.msk [vmem:[%s9 + $0x58] sm:$0xff] %vm1245, %v1220
  %1258 = vst.msk [vmem:[%s9 + $0x60] sm:$0xff] %vm1245, %v1222
  %1259 = vst.msk [vmem:[%s9 + $0x68] sm:$0xff] %vm1245, %v1224
  %1260 = vst.msk [vmem:[%s9 + $0x70] sm:$0xff] %vm1245, %v1226
  %1261 = vst.msk [vmem:[%s9 + $0x78] sm:$0xff] %vm1245, %v1228
  // Predicated region
  $region38: #{tpu_custom_call.1} parent=0 // pred_check
    _
  $region39: #{tpu_custom_call.1} parent=0 // pred_check_branch
    %1263 = sbr.rel (0) target = $region41
  $region40: #{tpu_custom_call.1} parent=0 // pred_region
    _
  $region41: #{tpu_custom_call.1} parent=0 // pred_fallthru
    _
  // Predicated region
  $region42: #{tpu_custom_call.1} parent=0 // pred_check
    _
  $region43: #{tpu_custom_call.1} parent=0 // pred_check_branch
    %1265 = sbr.rel (0) target = $region45
  $region44: #{tpu_custom_call.1} parent=0 // pred_region
    _
  $region45: #{tpu_custom_call.1} parent=0 // pred_fallthru
    _

</llo_original>
